<compile_context>
chip_gen: v6e
topology: v6e:2x2x1
jax: 0.10.0
libtpu: 0.0.40
codegen_flags: <defaults>
</compile_context>

<pallas_src>
import functools

import jax
import jax.numpy as jnp
from jax import lax
from jax.experimental import pallas as pl
from jax.experimental.pallas import tpu as pltpu


_VMEM_LIMIT_BYTES = 32 * 1024 * 1024      # safe on v5e/v6e/v7x
_TARGET_BLOCK_BYTES = 2 * 1024 * 1024     # ~2 MiB f32 working block
_MIN_GRID_STEPS = 8                       # keep both v7x TensorCores busy


def _round_up(x, m):
    return ((x + m - 1) // m) * m


def _cdiv(a, b):
    return (a + b - 1) // b


def _pick_tile(total, quantum, bytes_per_unit, other_steps):
    """Tile along a dim of length `total`: multiple of `quantum`, sized so the
    block is ~_TARGET_BLOCK_BYTES, shrunk (down to `quantum`) only if the grid
    would otherwise have fewer than _MIN_GRID_STEPS steps."""
    tile = max(quantum, (_TARGET_BLOCK_BYTES // bytes_per_unit) // quantum * quantum)
    tile = min(tile, _round_up(total, quantum))
    while tile > quantum and other_steps * _cdiv(total, tile) < _MIN_GRID_STEPS:
        tile = max(quantum, (tile // 2) // quantum * quantum)
    return tile


# ---------------------------------------------------------------------------
# channels_first kernel: block is (C, TL); normalize each spatial column over
# the channel (sublane) axis. Spatial lives on lanes -> lane-dense stores.
# ---------------------------------------------------------------------------
def _ln_channels_first_kernel(x_ref, w_ref, b_ref, o_ref, *, eps):
    x = x_ref[...].astype(jnp.float32)                       # (C, TL)
    mu = jnp.mean(x, axis=0, keepdims=True)                  # (1, TL)
    ex2 = jnp.mean(x * x, axis=0, keepdims=True)             # (1, TL)
    var = jnp.maximum(ex2 - mu * mu, 0.0)                    # single-pass var
    y = (x - mu) * lax.rsqrt(var + eps)                      # rsqrt -> EUP
    o_ref[...] = (w_ref[...] * y + b_ref[...]).astype(o_ref.dtype)


def layernorm_channels_first(x, weight, bias, eps=1e-6):
    """x: (B, C, *spatial). Normalizes over dim 1 (channels), NCHW kept native."""
    B, C = x.shape[0], x.shape[1]
    L = 1
    for s in x.shape[2:]:
        L *= s
    x3 = x.reshape(B, C, L)

    TL = _pick_tile(L, 128, C * 4, B)
    grid = (B, _cdiv(L, TL))                 # ragged last L-block handled by Pallas

    w2 = weight.reshape(C, 1).astype(jnp.float32)
    b2 = bias.reshape(C, 1).astype(jnp.float32)

    out = pl.pallas_call(
        functools.partial(_ln_channels_first_kernel, eps=eps),
        grid=grid,
        in_specs=[
            pl.BlockSpec((None, C, TL), lambda b, l: (b, 0, l)),
            pl.BlockSpec((C, 1), lambda b, l: (0, 0)),
            pl.BlockSpec((C, 1), lambda b, l: (0, 0)),
        ],
        out_specs=pl.BlockSpec((None, C, TL), lambda b, l: (b, 0, l)),
        out_shape=jax.ShapeDtypeStruct((B, C, L), x.dtype),
        compiler_params=pltpu.CompilerParams(
            dimension_semantics=("parallel", "parallel"),
            vmem_limit_bytes=_VMEM_LIMIT_BYTES),
    )(x3, w2, b2)
    return out.reshape(x.shape)


# ---------------------------------------------------------------------------
# channels_last, lane-dense grouped path (C < 128 and 128 % C == 0):
# rows of (M, C) are viewed as (M//g, g*C) with g = 128//C; per-segment stats
# are computed with one (g*C, g*C) block-diagonal (1/C) matmul on the MXU.
# ---------------------------------------------------------------------------
def _ln_channels_last_grouped_kernel(x_ref, w_ref, b_ref, p_ref, o_ref, *, eps):
    x = x_ref[...].astype(jnp.float32)                       # (TM, g*C) lane-dense
    p = p_ref[...]                                           # (g*C, g*C) block-diag of 1/C
    mu = jnp.dot(x, p, preferred_element_type=jnp.float32,
                 precision=lax.Precision.HIGHEST)            # segment mean, broadcast
    ex2 = jnp.dot(x * x, p, preferred_element_type=jnp.float32,
                  precision=lax.Precision.HIGHEST)           # segment E[x^2]
    var = jnp.maximum(ex2 - mu * mu, 0.0)
    y = (x - mu) * lax.rsqrt(var + eps)
    o_ref[...] = (w_ref[...] * y + b_ref[...]).astype(o_ref.dtype)


def _layernorm_channels_last_grouped(x, weight, bias, eps, M, C, g):
    gc = g * C
    Mg = M // g
    x2 = x.reshape(Mg, gc)                                   # free, contiguous view

    TM = _pick_tile(Mg, 8, gc * 4, 1)
    grid = (_cdiv(Mg, TM),)                                  # ragged last block OK

    wg = jnp.tile(weight.astype(jnp.float32), g).reshape(1, gc)
    bg = jnp.tile(bias.astype(jnp.float32), g).reshape(1, gc)
    seg = jnp.arange(gc) // C
    p = (seg[:, None] == seg[None, :]).astype(jnp.float32) / float(C)

    out = pl.pallas_call(
        functools.partial(_ln_channels_last_grouped_kernel, eps=eps),
        grid=grid,
        in_specs=[
            pl.BlockSpec((TM, gc), lambda i: (i, 0)),
            pl.BlockSpec((1, gc), lambda i: (0, 0)),
            pl.BlockSpec((1, gc), lambda i: (0, 0)),
            pl.BlockSpec((gc, gc), lambda i: (0, 0)),
        ],
        out_specs=pl.BlockSpec((TM, gc), lambda i: (i, 0)),
        out_shape=jax.ShapeDtypeStruct((Mg, gc), x.dtype),
        compiler_params=pltpu.CompilerParams(
            dimension_semantics=("parallel",),
            vmem_limit_bytes=_VMEM_LIMIT_BYTES),
    )(x2, wg, bg, p)
    return out.reshape(x.shape)


# ---------------------------------------------------------------------------
# channels_last, plain row-LayerNorm path (fallback for other C).
# ---------------------------------------------------------------------------
def _ln_channels_last_plain_kernel(x_ref, w_ref, b_ref, o_ref, *, eps):
    x = x_ref[...].astype(jnp.float32)                       # (TM, C)
    mu = jnp.mean(x, axis=-1, keepdims=True)
    ex2 = jnp.mean(x * x, axis=-1, keepdims=True)
    var = jnp.maximum(ex2 - mu * mu, 0.0)
    y = (x - mu) * lax.rsqrt(var + eps)
    o_ref[...] = (w_ref[...] * y + b_ref[...]).astype(o_ref.dtype)


def _layernorm_channels_last_plain(x, weight, bias, eps, M, C):
    x2 = x.reshape(M, C)
    # VMEM padding of the lane dim -> budget with at least 128 lanes per row.
    TM = _pick_tile(M, 8, max(C, 128) * 4, 1)
    grid = (_cdiv(M, TM),)

    w2 = weight.reshape(1, C).astype(jnp.float32)
    b2 = bias.reshape(1, C).astype(jnp.float32)

    out = pl.pallas_call(
        functools.partial(_ln_channels_last_plain_kernel, eps=eps),
        grid=grid,
        in_specs=[
            pl.BlockSpec((TM, C), lambda i: (i, 0)),
            pl.BlockSpec((1, C), lambda i: (0, 0)),
            pl.BlockSpec((1, C), lambda i: (0, 0)),
        ],
        out_specs=pl.BlockSpec((TM, C), lambda i: (i, 0)),
        out_shape=jax.ShapeDtypeStruct((M, C), x.dtype),
        compiler_params=pltpu.CompilerParams(
            dimension_semantics=("parallel",),
            vmem_limit_bytes=_VMEM_LIMIT_BYTES),
    )(x2, w2, b2)
    return out.reshape(x.shape)


def layernorm_channels_last(x, weight, bias, eps=1e-6):
    """x: (..., C). Normalizes over the last dim (== F.layer_norm)."""
    C = x.shape[-1]
    M = 1
    for s in x.shape[:-1]:
        M *= s
    if C < 128 and 128 % C == 0 and M % (128 // C) == 0:
        return _layernorm_channels_last_grouped(x, weight, bias, eps, M, C, 128 // C)
    return _layernorm_channels_last_plain(x, weight, bias, eps, M, C)


# ---------------------------------------------------------------------------
# Public entry point matching the PyTorch module's forward semantics.
# ---------------------------------------------------------------------------
def layer_norm(x, weight, bias, eps=1e-6, data_format="channels_first"):
    if data_format == "channels_last":
        return layernorm_channels_last(x, weight, bias, eps)
    elif data_format == "channels_first":
        return layernorm_channels_first(x, weight, bias, eps)
    else:
        raise NotImplementedError(data_format)


if __name__ == "__main__":
    key = jax.random.PRNGKey(0)
    kx, kw, kb, kx2, kx3, kx4, kw2, kb2, kx5 = jax.random.split(key, 9)

    eps = 1e-6
    C = 32
    w = 1.0 + 0.1 * jax.random.normal(kw, (C,), jnp.float32)
    b = 0.1 * jax.random.normal(kb, (C,), jnp.float32)

    ln_cf = jax.jit(functools.partial(layer_norm, eps=eps, data_format="channels_first"))
    ln_cl = jax.jit(functools.partial(layer_norm, eps=eps, data_format="channels_last"))

    def ref_cf(x):
        u = jnp.mean(x, axis=1, keepdims=True)
        s = jnp.mean((x - u) ** 2, axis=1, keepdims=True)
        return (w[None, :, None, None] * ((x - u) / jnp.sqrt(s + eps))
                + b[None, :, None, None])

    def ref_cl(x, wt, bs):
        mu = jnp.mean(x, axis=-1, keepdims=True)
        var = jnp.mean((x - mu) ** 2, axis=-1, keepdims=True)
        return ((x - mu) / jnp.sqrt(var + eps)) * wt + bs

    def check(y, r, tol=1e-4):
        assert y.shape == r.shape, (y.shape, r.shape)
        assert bool(jnp.all(jnp.isfinite(y)))
        err = float(jnp.max(jnp.abs(y - r)))
        assert err < tol, err

    # --- channels_first (module default), even shape -------------------------
    x_cf = jax.random.normal(kx, (2, C, 16, 16), jnp.float32)
    check(jax.block_until_ready(ln_cf(x_cf, w, b)), ref_cf(x_cf))

    # --- channels_first, ragged spatial (exercises masked last block) --------
    x_cfr = jax.random.normal(kx3, (2, C, 10, 13), jnp.float32)
    check(jax.block_until_ready(ln_cf(x_cfr, w, b)), ref_cf(x_cfr))

    # --- channels_last, small C (lane-dense grouped MXU path) ----------------
    x_cl = jax.random.normal(kx2, (2, 16, 16, C), jnp.float32)
    check(jax.block_until_ready(ln_cl(x_cl, w, b)), ref_cl(x_cl, w, b))

    # --- channels_last, small C, ragged rows ---------------------------------
    x_clr = jax.random.normal(kx4, (2, 10, 13, C), jnp.float32)
    check(jax.block_until_ready(ln_cl(x_clr, w, b)), ref_cl(x_clr, w, b))

    # --- channels_last, C that does not divide 128 (plain fallback path) -----
    C2 = 48
    w48 = 1.0 + 0.1 * jax.random.normal(kw2, (C2,), jnp.float32)
    b48 = 0.1 * jax.random.normal(kb2, (C2,), jnp.float32)
    x_cl48 = jax.random.normal(kx5, (2, 8, 8, C2), jnp.float32)
    check(jax.block_until_ready(ln_cl(x_cl48, w48, b48)), ref_cl(x_cl48, w48, b48))

    print("KERNEL_OK")
</pallas_src>

<mosaic_0001>
module attributes {stable_mosaic.version = 11 : i64} {
  func.func @_ln_channels_first_kernel(%arg0: i32, %arg1: i32, %arg2: memref<1x32x128xf32, #tpu.memory_space<vmem>>, %arg3: memref<32x1xf32, #tpu.memory_space<vmem>>, %arg4: memref<32x1xf32, #tpu.memory_space<vmem>>, %arg5: memref<1x32x128xf32, #tpu.memory_space<vmem>>) attributes {dimension_semantics = [#tpu.dimension_semantics<parallel>, #tpu.dimension_semantics<parallel>], iteration_bounds = array<i64: 2, 2>, scalar_prefetch = 0 : i64, scratch_operands = 0 : i64, tpu.core_type = #tpu.core_type<tc>, window_params = [{transform_indices = @transform_0, window_bounds = array<i64: 1, 32, 128>}, {pipeline_mode = #tpu.pipeline_mode<synchronous>, transform_indices = @transform_1, window_bounds = array<i64: 32, 1>}, {pipeline_mode = #tpu.pipeline_mode<synchronous>, transform_indices = @transform_2, window_bounds = array<i64: 32, 1>}, {transform_indices = @transform_3, window_bounds = array<i64: 1, 32, 128>}]} {
    %c0 = arith.constant 0 : index
    %c0_0 = arith.constant 0 : index
    %c0_1 = arith.constant 0 : index
    %0 = vector.load %arg2[%c0, %c0_0, %c0_1] : memref<1x32x128xf32, #tpu.memory_space<vmem>>, vector<1x32x128xf32>
    %1 = vector.shape_cast %0 : vector<1x32x128xf32> to vector<32x128xf32>
    %cst = arith.constant dense<0.000000e+00> : vector<128xf32>
    %2 = vector.multi_reduction <add>, %1, %cst [0] : vector<32x128xf32> to vector<128xf32>
    %3 = vector.shape_cast %2 : vector<128xf32> to vector<1x128xf32>
    %cst_2 = arith.constant 3.200000e+01 : f32
    %4 = vector.broadcast %cst_2 : f32 to vector<1x128xf32>
    %5 = arith.divf %3, %4 : vector<1x128xf32>
    %6 = arith.mulf %1, %1 : vector<32x128xf32>
    %cst_3 = arith.constant dense<0.000000e+00> : vector<128xf32>
    %7 = vector.multi_reduction <add>, %6, %cst_3 [0] : vector<32x128xf32> to vector<128xf32>
    %8 = vector.shape_cast %7 : vector<128xf32> to vector<1x128xf32>
    %cst_4 = arith.constant 3.200000e+01 : f32
    %9 = vector.broadcast %cst_4 : f32 to vector<1x128xf32>
    %10 = arith.divf %8, %9 : vector<1x128xf32>
    %11 = arith.mulf %5, %5 : vector<1x128xf32>
    %12 = arith.subf %10, %11 : vector<1x128xf32>
    %cst_5 = arith.constant 0.000000e+00 : f32
    %13 = vector.broadcast %cst_5 : f32 to vector<1x128xf32>
    %14 = arith.maximumf %12, %13 : vector<1x128xf32>
    %15 = vector.broadcast %5 : vector<1x128xf32> to vector<32x128xf32>
    %16 = arith.subf %1, %15 : vector<32x128xf32>
    %cst_6 = arith.constant 9.99999997E-7 : f32
    %17 = vector.broadcast %cst_6 : f32 to vector<1x128xf32>
    %18 = arith.addf %14, %17 : vector<1x128xf32>
    %19 = math.rsqrt %18 : vector<1x128xf32>
    %20 = vector.broadcast %19 : vector<1x128xf32> to vector<32x128xf32>
    %21 = arith.mulf %16, %20 : vector<32x128xf32>
    %c0_7 = arith.constant 0 : index
    %c0_8 = arith.constant 0 : index
    %22 = vector.load %arg3[%c0_7, %c0_8] : memref<32x1xf32, #tpu.memory_space<vmem>>, vector<32x1xf32>
    %23 = vector.broadcast %22 : vector<32x1xf32> to vector<32x128xf32>
    %24 = arith.mulf %23, %21 : vector<32x128xf32>
    %c0_9 = arith.constant 0 : index
    %c0_10 = arith.constant 0 : index
    %25 = vector.load %arg4[%c0_9, %c0_10] : memref<32x1xf32, #tpu.memory_space<vmem>>, vector<32x1xf32>
    %26 = vector.broadcast %25 : vector<32x1xf32> to vector<32x128xf32>
    %27 = arith.addf %24, %26 : vector<32x128xf32>
    %c0_11 = arith.constant 0 : index
    %c0_12 = arith.constant 0 : index
    %c0_13 = arith.constant 0 : index
    %28 = vector.load %arg5[%c0_11, %c0_12, %c0_13] : memref<1x32x128xf32, #tpu.memory_space<vmem>>, vector<1x32x128xf32>
    %29 = vector.shape_cast %28 : vector<1x32x128xf32> to vector<32x128xf32>
    %30 = vector.shape_cast %27 : vector<32x128xf32> to vector<1x32x128xf32>
    tpu.vector_store %arg5[%c0_11, %c0_12, %c0_13], %30 {strides = array<i32>} : memref<1x32x128xf32, #tpu.memory_space<vmem>>, vector<1x32x128xf32>,
    return
  }
  func.func @transform_0(%arg0: i32, %arg1: i32) -> (i32, i32, i32) {
    %c0_i32 = arith.constant 0 : i32
    %c0_i32_0 = arith.constant 0 : i32
    return %arg0, %c0_i32, %arg1 : i32, i32, i32
  }
  func.func @transform_1(%arg0: i32, %arg1: i32) -> (i32, i32) {
    %c0_i32 = arith.constant 0 : i32
    %c0_i32_0 = arith.constant 0 : i32
    %c0_i32_1 = arith.constant 0 : i32
    return %c0_i32, %c0_i32_0 : i32, i32
  }
  func.func @transform_2(%arg0: i32, %arg1: i32) -> (i32, i32) {
    %c0_i32 = arith.constant 0 : i32
    %c0_i32_0 = arith.constant 0 : i32
    %c0_i32_1 = arith.constant 0 : i32
    return %c0_i32, %c0_i32_0 : i32, i32
  }
  func.func @transform_3(%arg0: i32, %arg1: i32) -> (i32, i32, i32) {
    %c0_i32 = arith.constant 0 : i32
    %c0_i32_0 = arith.constant 0 : i32
    return %arg0, %c0_i32, %arg1 : i32, i32, i32
  }
}

</mosaic_0001>

<llo_original>
// kernel: layer_norm.1
$region0: #{layer_norm.1}
  #allocation0 [shape = 'u32[]', space=smem, size = 0x4, offset = 0x4, fixed_abs, tag = 'smem constant byte address 0x4 - core index']
  #allocation1 [shape = 'u32[144,128]{1,0:T(1,128)}', space=vmem, size = 0x12000, scoped, tag = 'internal scratch']
  %s0 = inlined_call_operand.vmem [shape: f32[2,32,256], index: 0, kind: input, shape index: {}]
  %s1 = inlined_call_operand.vmem [shape: f32[32,1], index: 1, kind: input, shape index: {}]
  %s2 = inlined_call_operand.vmem [shape: f32[32,1], index: 2, kind: input, shape index: {}]
  %s3 = inlined_call_operand.vmem [shape: f32[2,32,256], index: 3, kind: output, shape index: {}]
  %s4 = sld [smem:[#allocation0]]
  $region117: #{layer_norm.1} parent=0
    _
  %s6 = ssub.s32 1, %s4
  %s7 = scalar_select 0, %s6, %s4
  $region1: #{layer_norm.1} parent=0
    #allocation2 [shape = 'u8[32768]{0}', space=vmem, size = 0x8000, scoped, tag = 'input window, operand 0']
    #allocation3 [shape = 'u8[32768]{0}', space=vmem, size = 0x8000, scoped, tag = 'output window, operand 0']
    loop: start=0, step=1, limit=6
    $region2: #{layer_norm.1} parent=1 // loop_pre_header
      _
    $region3: #{layer_norm.1} parent=1 // loop_header
      %s9 = sphi 0, %s13
      %p10 = scmp.ge.s32.totalorder %s9, 6
      %s16 = sphi 0, %s28
      %s17 = sphi 0, %s24
      %s18 = sphi 0, %s16
      %s19 = sphi 0, %s17
      %s20 = sphi 0, %s18
      %s21 = sphi 0, %s19
      %s33 = sphi 0, %s35
      %s36 = sphi 0, %s33
      %s37 = sphi 0, %s36
      %s53 = sphi 0, %s37
      %s57 = sphi 0, %s57
      %s59 = sphi 0, %s57
      %s60 = sphi 0, %s59
      %s74 = sphi 0, %s60
      %s78 = sphi 0, %s78
      %s80 = sphi 0, %s78
      %s81 = sphi 0, %s80
      %s95 = sphi 0, %s81
      %s103 = sphi 0, %s105
      %s106 = sphi 0, %s103
      %s107 = sphi 0, %s106
      %s123 = sphi 0, %s107
    $region4: #{layer_norm.1} parent=1 // loop_header_branch
      %12 = sbr.rel (%p10) target = $region8
    $region5: #{layer_norm.1} parent=1 // loop_body
      %s14 = ssub.s32 %s9, 1
      %s15 = ssub.s32 %s9, 2
      %s22 = sadd.s32 1, %s17
      %p23 = scmp.ge.s32.totalorder %s22, 2
      %s24 = scalar_select %p23, 0, %s22
      %s25 = sadd.s32 1, %s16
      %s26 = scalar_select %p23, %s25, %s16
      %p27 = scmp.ge.s32.totalorder %s26, 2
      %s28 = scalar_select %p27, 0, %s26
      %s29 = ssub.s32 %s16, %s28
      %s30 = ssub.s32 %s17, %s24
      %s31 = sor.u32 %s29, %s30
      %p32 = scmp.eq.s32.totalorder %s31, 0
      %s34 = sadd.s32 %s33, 1
      %s35 = scalar_select %p32, %s33, %s34
      %p38 = pneg %p32
      %p39 = scmp.eq.s32.totalorder %s9, 3
      %p40 = por %p38, %p39
      %p41 = scmp.ne.s32.totalorder %s33, %s36
      %p42 = scmp.eq.s32.totalorder %s9, 0
      %p43 = por %p41, %p42
      %p44 = scmp.ne.s32.totalorder %s33, %s36
      %p45 = scmp.eq.s32.totalorder %s14, 3
      %p46 = por %p44, %p45
      %p47 = scmp.ne.s32.totalorder %s36, %s37
      %p48 = scmp.eq.s32.totalorder %s14, 0
      %p49 = por %p47, %p48
      %p50 = scmp.ne.s32.totalorder %s36, %s37
      %p51 = scmp.eq.s32.totalorder %s15, 3
      %p52 = por %p50, %p51
      %p54 = scmp.ne.s32.totalorder %s37, %s53
      %p55 = scmp.eq.s32.totalorder %s15, 0
      %p56 = por %p54, %p55
      %s58 = sadd.s32 %s57, 1
      %p61 = scmp.eq.s32.totalorder %s9, 3
      %p62 = scmp.ne.s32.totalorder %s57, %s59
      %p63 = scmp.eq.s32.totalorder %s9, 0
      %p64 = por %p62, %p63
      %p65 = scmp.ne.s32.totalorder %s57, %s59
      %p66 = scmp.eq.s32.totalorder %s14, 3
      %p67 = por %p65, %p66
      %p68 = scmp.ne.s32.totalorder %s59, %s60
      %p69 = scmp.eq.s32.totalorder %s14, 0
      %p70 = por %p68, %p69
      %p71 = scmp.ne.s32.totalorder %s59, %s60
      %p72 = scmp.eq.s32.totalorder %s15, 3
      %p73 = por %p71, %p72
      %p75 = scmp.ne.s32.totalorder %s60, %s74
      %p76 = scmp.eq.s32.totalorder %s15, 0
      %p77 = por %p75, %p76
      %s79 = sadd.s32 %s78, 1
      %p82 = scmp.eq.s32.totalorder %s9, 3
      %p83 = scmp.ne.s32.totalorder %s78, %s80
      %p84 = scmp.eq.s32.totalorder %s9, 0
      %p85 = por %p83, %p84
      %p86 = scmp.ne.s32.totalorder %s78, %s80
      %p87 = scmp.eq.s32.totalorder %s14, 3
      %p88 = por %p86, %p87
      %p89 = scmp.ne.s32.totalorder %s80, %s81
      %p90 = scmp.eq.s32.totalorder %s14, 0
      %p91 = por %p89, %p90
      %p92 = scmp.ne.s32.totalorder %s80, %s81
      %p93 = scmp.eq.s32.totalorder %s15, 3
      %p94 = por %p92, %p93
      %p96 = scmp.ne.s32.totalorder %s81, %s95
      %p97 = scmp.eq.s32.totalorder %s15, 0
      %p98 = por %p96, %p97
      %s99 = ssub.s32 %s16, %s28
      %s100 = ssub.s32 %s17, %s24
      %s101 = sor.u32 %s99, %s100
      %p102 = scmp.eq.s32.totalorder %s101, 0
      %s104 = sadd.s32 %s103, 1
      %s105 = scalar_select %p102, %s103, %s104
      %p108 = pneg %p102
      %p109 = scmp.eq.s32.totalorder %s9, 3
      %p110 = por %p108, %p109
      %p111 = scmp.ne.s32.totalorder %s103, %s106
      %p112 = scmp.eq.s32.totalorder %s9, 0
      %p113 = por %p111, %p112
      %p114 = scmp.ne.s32.totalorder %s103, %s106
      %p115 = scmp.eq.s32.totalorder %s14, 3
      %p116 = por %p114, %p115
      %p117 = scmp.ne.s32.totalorder %s106, %s107
      %p118 = scmp.eq.s32.totalorder %s14, 0
      %p119 = por %p117, %p118
      %p120 = scmp.ne.s32.totalorder %s106, %s107
      %p121 = scmp.eq.s32.totalorder %s15, 3
      %p122 = por %p120, %p121
      %p124 = scmp.ne.s32.totalorder %s107, %s123
      %p125 = scmp.eq.s32.totalorder %s15, 0
      %p126 = por %p124, %p125
      %p127 = scmp.le.s32.totalorder 1, %s9
      %p128 = scmp.lt.s32.totalorder %s9, 5
      %p129 = pnand %p127, %p128
      %p130 = pneg %p129
      // Predicated region
      $region9: #{layer_norm.1} parent=5 // pred_check
        _
      $region10: #{layer_norm.1} parent=5 // pred_check_branch
        %132 = sbr.rel (%p129) target = $region12
      $region11: #{layer_norm.1} parent=5 // pred_region
        %s133 = ssub.s32 %s9, 1
        // Predicated region
        $region13: #{layer_norm.1} parent=11 // pred_check
          %p134 = pneg %p70
        $region14: #{layer_norm.1} parent=11 // pred_check_branch
          %136 = sbr.rel (%p134) target = $region16
        $region15: #{layer_norm.1} parent=11 // pred_region
          _
        $region16: #{layer_norm.1} parent=11 // pred_fallthru
          _
        // Predicated region
        $region17: #{layer_norm.1} parent=11 // pred_check
          %p137 = pneg %p91
        $region18: #{layer_norm.1} parent=11 // pred_check_branch
          %139 = sbr.rel (%p137) target = $region20
        $region19: #{layer_norm.1} parent=11 // pred_region
          _
        $region20: #{layer_norm.1} parent=11 // pred_fallthru
          _
      $region12: #{layer_norm.1} parent=5 // pred_fallthru
        _
      %p140 = scmp.lt.s32.totalorder %s9, 4
      // Predicated region
      $region21: #{layer_norm.1} parent=5 // pred_check
        %p141 = pneg %p140
      $region22: #{layer_norm.1} parent=5 // pred_check_branch
        %143 = sbr.rel (%p141) target = $region24
      $region23: #{layer_norm.1} parent=5 // pred_region
        // Predicated region
        $region25: #{layer_norm.1} parent=23 // pred_check
          %p144 = pneg %p43
        $region26: #{layer_norm.1} parent=23 // pred_check_branch
          %146 = sbr.rel (%p144) target = $region28
        $region27: #{layer_norm.1} parent=23 // pred_region
          %s147 = sand.u32 %s33, 1
          %s148 = sand.u32 %s33, 1
          %s149 = smul.addr %s148, 32
          %s150 = scalar_lea.vmem [#allocation2], %s149
          %s151 = smul.addr %s16, 8
          %s152 = sadd.s32 %s17, %s151
          %s153 = smul.addr %s152, 8
          %s154 = scalar_lea.vmem %s0, %s153
          // Predicated region
          $region29: #{layer_norm.1} parent=27 // pred_check
            _
          $region30: #{layer_norm.1} parent=27 // pred_check_branch
            %156 = sbr.rel (0) target = $region32
          $region31: #{layer_norm.1} parent=27 // pred_region
            // Predicated region
            $region33: #{layer_norm.1} parent=31 // pred_check
              _
            $region34: #{layer_norm.1} parent=31 // pred_check_branch
              %158 = sbr.rel (0) target = $region36
            $region35: #{layer_norm.1} parent=31 // pred_region
              // Predicated region
              $region48: #{layer_norm.1} parent=35 // pred_check
                _
              $region49: #{layer_norm.1} parent=35 // pred_check_branch
                %180 = sbr.rel (0) target = $region51
              $region50: #{layer_norm.1} parent=35 // pred_region
                loop: start=0, step=1, limit=1
                $region52: #{layer_norm.1} parent=50 // loop_pre_header
                  _
                $region53: #{layer_norm.1} parent=50 // loop_header
                  %s182 = sphi 0, %s186
                  %p183 = scmp.ge.s32.totalorder %s182, 1
                  %s187 = sphi %s154, %s154
                  %s188 = sphi %s150, %s150
                $region54: #{layer_norm.1} parent=50 // loop_header_branch
                  %185 = sbr.rel (%p183) target = $region58
                $region55: #{layer_norm.1} parent=50 // loop_body
                  %v189 = vld [vmem:[%s187] sm:$0xff]
                  %190 = vst [vmem:[%s188] sm:$0xff] %v189
                  %v191 = vld [vmem:[%s187 + $0x10] sm:$0xff]
                  %192 = vst [vmem:[%s188 + $0x8] sm:$0xff] %v191
                  %v193 = vld [vmem:[%s187 + $0x20] sm:$0xff]
                  %194 = vst [vmem:[%s188 + $0x10] sm:$0xff] %v193
                  %v195 = vld [vmem:[%s187 + $0x30] sm:$0xff]
                  %196 = vst [vmem:[%s188 + $0x18] sm:$0xff] %v195
                $region56: #{layer_norm.1} parent=50 // loop_footer
                  %s186 = sadd.s32 1, %s182
                $region57: #{layer_norm.1} parent=50 // loop_footer_branch
                  %181 = sbr.rel target = $region53
                $region58: #{layer_norm.1} parent=50 // loop_exit
                  _
              $region51: #{layer_norm.1} parent=35 // pred_fallthru
                _
              // Predicated region
              $region59: #{layer_norm.1} parent=35 // pred_check
                _
              $region60: #{layer_norm.1} parent=35 // pred_check_branch
                %198 = sbr.rel target = $region62
              $region61: #{layer_norm.1} parent=35 // pred_region
                _
              $region62: #{layer_norm.1} parent=35 // pred_fallthru
                _
            $region36: #{layer_norm.1} parent=31 // pred_fallthru
              _
            // Predicated region
            $region37: #{layer_norm.1} parent=31 // pred_check
              _
            $region38: #{layer_norm.1} parent=31 // pred_check_branch
              %160 = sbr.rel target = $region40
            $region39: #{layer_norm.1} parent=31 // pred_region
              %s162 = ssub.s32 256, 1
              loop: start=0, step=1, limit=1
              $region41: #{layer_norm.1} parent=39 // loop_pre_header
                _
              $region42: #{layer_norm.1} parent=39 // loop_header
                %s164 = sphi 0, %s168
                %p165 = scmp.ge.s32.totalorder %s164, 1
                %s169 = sphi %s154, %s154
                %s170 = sphi %s150, %s150
              $region43: #{layer_norm.1} parent=39 // loop_header_branch
                %167 = sbr.rel (%p165) target = $region47
              $region44: #{layer_norm.1} parent=39 // loop_body
                %v171 = vld [vmem:[%s169] sm:%s162]
                %172 = vst [vmem:[%s170] sm:%s162] %v171
                %v173 = vld [vmem:[%s169 + $0x10] sm:%s162]
                %174 = vst [vmem:[%s170 + $0x8] sm:%s162] %v173
                %v175 = vld [vmem:[%s169 + $0x20] sm:%s162]
                %176 = vst [vmem:[%s170 + $0x10] sm:%s162] %v175
                %v177 = vld [vmem:[%s169 + $0x30] sm:%s162]
                %178 = vst [vmem:[%s170 + $0x18] sm:%s162] %v177
              $region45: #{layer_norm.1} parent=39 // loop_footer
                %s168 = sadd.s32 1, %s164
              $region46: #{layer_norm.1} parent=39 // loop_footer_branch
                %163 = sbr.rel target = $region42
              $region47: #{layer_norm.1} parent=39 // loop_exit
                _
            $region40: #{layer_norm.1} parent=31 // pred_fallthru
              _
          $region32: #{layer_norm.1} parent=27 // pred_fallthru
            _
          %199 = vnop
        $region28: #{layer_norm.1} parent=23 // pred_fallthru
          _
      $region24: #{layer_norm.1} parent=5 // pred_fallthru
        _
      %p200 = scmp.le.s32.totalorder 1, %s9
      %p201 = scmp.lt.s32.totalorder %s9, 5
      %p202 = pnand %p200, %p201
      %p203 = pneg %p202
      // Predicated region
      $region63: #{layer_norm.1} parent=5 // pred_check
        _
      $region64: #{layer_norm.1} parent=5 // pred_check_branch
        %205 = sbr.rel (%p202) target = $region66
      $region65: #{layer_norm.1} parent=5 // pred_region
        %s206 = ssub.s32 %s9, 1
        %s207 = sand.u32 %s36, 1
        %s208 = sand.u32 %s36, 1
        %s209 = smul.addr %s208, 32
        %s210 = scalar_lea.vmem [#allocation2], %s209
        // Predicated region
        $region67: #{layer_norm.1} parent=65 // pred_check
          %p211 = pneg %p49
        $region68: #{layer_norm.1} parent=65 // pred_check_branch
          %213 = sbr.rel (%p211) target = $region70
        $region69: #{layer_norm.1} parent=65 // pred_region
          _
        $region70: #{layer_norm.1} parent=65 // pred_fallthru
          _
        %s214 = sand.u32 %s36, 1
        %s215 = sand.u32 %s36, 1
        %s216 = smul.addr %s215, 32
        %s217 = scalar_lea.vmem [#allocation2], %s216
        %p218 = pneg %p49
        %p219 = pneg %p46
        %p220 = pneg %p70
        %p221 = pneg %p67
        %p222 = pneg %p91
        %p223 = pneg %p88
        %p224 = pneg %p119
        %p225 = pneg %p116
        %s226 = sand.u32 %s106, 1
        %s227 = sand.u32 %s106, 1
        %s228 = smul.addr %s227, 32
        %s229 = scalar_lea.vmem [#allocation3], %s228
        %v230 = vld [vmem:[%s210] sm:$0xff]
        %v231 = vld [vmem:[%s210 + $0x8] sm:$0xff]
        %v232 = vld [vmem:[%s210 + $0x10] sm:$0xff]
        %v233 = vld [vmem:[%s210 + $0x18] sm:$0xff]
        %v234 = vadd.f32 %v230, %v231
        %v235 = vadd.f32 %v234, %v232
        %v236 = vadd.f32 %v235, %v233
        %v237 = vrot.slane %v236, 4
        %v238 = vadd.f32 %v236, %v237
        %v239 = vrot.slane %v238, 2
        %v240 = vadd.f32 %v238, %v239
        %v241 = vrot.slane %v240, 1
        %v242 = vadd.f32 %v240, %v241
        %v243 = vrcp.pop 32.0
        %v244 = vmul.f32 %v242, %v243
        %v245 = vmul.f32 %v230, %v230
        %v246 = vmul.f32 %v231, %v231
        %v247 = vmul.f32 %v232, %v232
        %v248 = vmul.f32 %v233, %v233
        %v249 = vadd.f32 %v245, %v246
        %v250 = vadd.f32 %v249, %v247
        %v251 = vadd.f32 %v250, %v248
        %v252 = vrot.slane %v251, 4
        %v253 = vadd.f32 %v251, %v252
        %v254 = vrot.slane %v253, 2
        %v255 = vadd.f32 %v253, %v254
        %v256 = vrot.slane %v255, 1
        %v257 = vadd.f32 %v255, %v256
        %v258 = vmul.f32 %v257, %v243
        %v259 = vmul.f32 %v244, %v244
        %v260 = vsub.f32 %v258, %v259
        %v261 = vmax.f32 %v260, 0.0
        %v262 = vsub.f32 %v230, %v244
        %v263 = vsub.f32 %v231, %v244
        %v264 = vsub.f32 %v232, %v244
        %v265 = vsub.f32 %v233, %v244
        %v266 = vadd.f32 %v261, 1e-06
        %v267 = vrsqrt.pop %v266
        %v268 = vmul.f32 %v262, %v267
        %v269 = vmul.f32 %v263, %v267
        %v270 = vmul.f32 %v264, %v267
        %v271 = vmul.f32 %v265, %v267
        %v272 = vld [vmem:[%s1] sm:$0xff]
        %v273 = vld [vmem:[%s1 + $0x8] sm:$0xff]
        %v274 = vld [vmem:[%s1 + $0x10] sm:$0xff]
        %v275 = vld [vmem:[%s1 + $0x18] sm:$0xff]
        %277 = vset.pattern.permute.xlu0 0
        %278 = vperm.xlu0 %277, %v272
        %v279 = vpop.permute.xlu0 %278
        %282 = vset.pattern.permute.xlu0 0
        %283 = vperm.xlu0 %282, %v273
        %v284 = vpop.permute.xlu0 %283
        %287 = vset.pattern.permute.xlu0 0
        %288 = vperm.xlu0 %287, %v274
        %v289 = vpop.permute.xlu0 %288
        %292 = vset.pattern.permute.xlu0 0
        %293 = vperm.xlu0 %292, %v275
        %v294 = vpop.permute.xlu0 %293
        %v296 = vmul.f32 %v279, %v268
        %v297 = vmul.f32 %v284, %v269
        %v298 = vmul.f32 %v289, %v270
        %v299 = vmul.f32 %v294, %v271
        %v300 = vld [vmem:[%s2] sm:$0xff]
        %v301 = vld [vmem:[%s2 + $0x8] sm:$0xff]
        %v302 = vld [vmem:[%s2 + $0x10] sm:$0xff]
        %v303 = vld [vmem:[%s2 + $0x18] sm:$0xff]
        %305 = vset.pattern.permute.xlu0 0
        %306 = vperm.xlu0 %305, %v300
        %v307 = vpop.permute.xlu0 %306
        %310 = vset.pattern.permute.xlu0 0
        %311 = vperm.xlu0 %310, %v301
        %v312 = vpop.permute.xlu0 %311
        %315 = vset.pattern.permute.xlu0 0
        %316 = vperm.xlu0 %315, %v302
        %v317 = vpop.permute.xlu0 %316
        %320 = vset.pattern.permute.xlu0 0
        %321 = vperm.xlu0 %320, %v303
        %v322 = vpop.permute.xlu0 %321
        %v324 = vadd.f32 %v296, %v307
        %v325 = vadd.f32 %v297, %v312
        %v326 = vadd.f32 %v298, %v317
        %v327 = vadd.f32 %v299, %v322
        %328 = vst [vmem:[%s229] sm:$0xff] %v324
        %329 = vst [vmem:[%s229 + $0x8] sm:$0xff] %v325
        %330 = vst [vmem:[%s229 + $0x10] sm:$0xff] %v326
        %331 = vst [vmem:[%s229 + $0x18] sm:$0xff] %v327
        %s332 = sand.u32 %s106, 1
        %s333 = sand.u32 %s106, 1
        %s334 = smul.addr %s333, 32
        %s335 = scalar_lea.vmem [#allocation3], %s334
        // Predicated region
        $region71: #{layer_norm.1} parent=65 // pred_check
          %p336 = pneg %p116
        $region72: #{layer_norm.1} parent=65 // pred_check_branch
          %338 = sbr.rel (%p336) target = $region74
        $region73: #{layer_norm.1} parent=65 // pred_region
          %s339 = smul.addr %s18, 8
          %s340 = sadd.s32 %s19, %s339
          %s341 = smul.addr %s340, 8
          %s342 = scalar_lea.vmem %s3, %s341
          // Predicated region
          $region75: #{layer_norm.1} parent=73 // pred_check
            _
          $region76: #{layer_norm.1} parent=73 // pred_check_branch
            %344 = sbr.rel (0) target = $region78
          $region77: #{layer_norm.1} parent=73 // pred_region
            // Predicated region
            $region79: #{layer_norm.1} parent=77 // pred_check
              _
            $region80: #{layer_norm.1} parent=77 // pred_check_branch
              %346 = sbr.rel (0) target = $region82
            $region81: #{layer_norm.1} parent=77 // pred_region
              // Predicated region
              $region94: #{layer_norm.1} parent=81 // pred_check
                _
              $region95: #{layer_norm.1} parent=81 // pred_check_branch
                %368 = sbr.rel (0) target = $region97
              $region96: #{layer_norm.1} parent=81 // pred_region
                loop: start=0, step=1, limit=1
                $region98: #{layer_norm.1} parent=96 // loop_pre_header
                  _
                $region99: #{layer_norm.1} parent=96 // loop_header
                  %s370 = sphi 0, %s374
                  %p371 = scmp.ge.s32.totalorder %s370, 1
                  %s375 = sphi %s335, %s335
                  %s376 = sphi %s342, %s342
                $region100: #{layer_norm.1} parent=96 // loop_header_branch
                  %373 = sbr.rel (%p371) target = $region104
                $region101: #{layer_norm.1} parent=96 // loop_body
                  %v377 = vld [vmem:[%s375] sm:$0xff]
                  %378 = vst [vmem:[%s376] sm:$0xff] %v377
                  %v379 = vld [vmem:[%s375 + $0x8] sm:$0xff]
                  %380 = vst [vmem:[%s376 + $0x10] sm:$0xff] %v379
                  %v381 = vld [vmem:[%s375 + $0x10] sm:$0xff]
                  %382 = vst [vmem:[%s376 + $0x20] sm:$0xff] %v381
                  %v383 = vld [vmem:[%s375 + $0x18] sm:$0xff]
                  %384 = vst [vmem:[%s376 + $0x30] sm:$0xff] %v383
                $region102: #{layer_norm.1} parent=96 // loop_footer
                  %s374 = sadd.s32 1, %s370
                $region103: #{layer_norm.1} parent=96 // loop_footer_branch
                  %369 = sbr.rel target = $region99
                $region104: #{layer_norm.1} parent=96 // loop_exit
                  _
              $region97: #{layer_norm.1} parent=81 // pred_fallthru
                _
              // Predicated region
              $region105: #{layer_norm.1} parent=81 // pred_check
                _
              $region106: #{layer_norm.1} parent=81 // pred_check_branch
                %386 = sbr.rel target = $region108
              $region107: #{layer_norm.1} parent=81 // pred_region
                _
              $region108: #{layer_norm.1} parent=81 // pred_fallthru
                _
            $region82: #{layer_norm.1} parent=77 // pred_fallthru
              _
            // Predicated region
            $region83: #{layer_norm.1} parent=77 // pred_check
              _
            $region84: #{layer_norm.1} parent=77 // pred_check_branch
              %348 = sbr.rel target = $region86
            $region85: #{layer_norm.1} parent=77 // pred_region
              %s350 = ssub.s32 256, 1
              loop: start=0, step=1, limit=1
              $region87: #{layer_norm.1} parent=85 // loop_pre_header
                _
              $region88: #{layer_norm.1} parent=85 // loop_header
                %s352 = sphi 0, %s356
                %p353 = scmp.ge.s32.totalorder %s352, 1
                %s357 = sphi %s335, %s335
                %s358 = sphi %s342, %s342
              $region89: #{layer_norm.1} parent=85 // loop_header_branch
                %355 = sbr.rel (%p353) target = $region93
              $region90: #{layer_norm.1} parent=85 // loop_body
                %v359 = vld [vmem:[%s357] sm:%s350]
                %360 = vst [vmem:[%s358] sm:%s350] %v359
                %v361 = vld [vmem:[%s357 + $0x8] sm:%s350]
                %362 = vst [vmem:[%s358 + $0x10] sm:%s350] %v361
                %v363 = vld [vmem:[%s357 + $0x10] sm:%s350]
                %364 = vst [vmem:[%s358 + $0x20] sm:%s350] %v363
                %v365 = vld [vmem:[%s357 + $0x18] sm:%s350]
                %366 = vst [vmem:[%s358 + $0x30] sm:%s350] %v365
              $region91: #{layer_norm.1} parent=85 // loop_footer
                %s356 = sadd.s32 1, %s352
              $region92: #{layer_norm.1} parent=85 // loop_footer_branch
                %351 = sbr.rel target = $region88
              $region93: #{layer_norm.1} parent=85 // loop_exit
                _
            $region86: #{layer_norm.1} parent=77 // pred_fallthru
              _
          $region78: #{layer_norm.1} parent=73 // pred_fallthru
            _
          %387 = vnop
        $region74: #{layer_norm.1} parent=65 // pred_fallthru
          _
      $region66: #{layer_norm.1} parent=5 // pred_fallthru
        _
      %p388 = scmp.le.s32.totalorder 2, %s9
      // Predicated region
      $region109: #{layer_norm.1} parent=5 // pred_check
        %p389 = pneg %p388
      $region110: #{layer_norm.1} parent=5 // pred_check_branch
        %391 = sbr.rel (%p389) target = $region112
      $region111: #{layer_norm.1} parent=5 // pred_region
        %s392 = ssub.s32 %s9, 2
        // Predicated region
        $region113: #{layer_norm.1} parent=111 // pred_check
          %p393 = pneg %p122
        $region114: #{layer_norm.1} parent=111 // pred_check_branch
          %395 = sbr.rel (%p393) target = $region116
        $region115: #{layer_norm.1} parent=111 // pred_region
          %s396 = sand.u32 %s107, 1
          %s397 = sand.u32 %s107, 1
          %s398 = smul.addr %s397, 32
          %s399 = scalar_lea.vmem [#allocation3], %s398
        $region116: #{layer_norm.1} parent=111 // pred_fallthru
          _
      $region112: #{layer_norm.1} parent=5 // pred_fallthru
        _
    $region6: #{layer_norm.1} parent=1 // loop_footer
      %s13 = sadd.s32 1, %s9
    $region7: #{layer_norm.1} parent=1 // loop_footer_branch
      %8 = sbr.rel target = $region3
    $region8: #{layer_norm.1} parent=1 // loop_exit
      _

</llo_original>
